<compile_context>
chip_gen: v5e
topology: v5e:2x2
jax: 0.10.0
libtpu: 0.0.40
codegen_flags: <defaults>
</compile_context>

<pallas_src>
import math

import jax
import jax.numpy as jnp
import numpy as np
from jax.experimental import pallas as pl
from jax.experimental.pallas import tpu as pltpu

HAV_WEIGHT = 0.3
EARTH_RADIUS_KM = 6371.0
DEG2RAD = math.pi / 180.0
LANE = 128


def _combined_loss_kernel(pred_ref, tgt_ref, sse_ref, csum_ref):
    """pred_ref/tgt_ref: (2, TR, 128) f32 slabs [lat, lon] in degrees.
    sse_ref/csum_ref: (1, 8, 128) f32 accumulator blocks (one per split)."""

    @pl.when(pl.program_id(1) == 0)
    def _init():
        sse_ref[...] = jnp.zeros_like(sse_ref)
        csum_ref[...] = jnp.zeros_like(csum_ref)

    p_lat_deg = pred_ref[0]
    p_lon_deg = pred_ref[1]
    t_lat_deg = tgt_ref[0]
    t_lon_deg = tgt_ref[1]

    # ---- MSE partial: sum of squared errors (degrees, like nn.MSELoss) ----
    d_lat = p_lat_deg - t_lat_deg
    d_lon = p_lon_deg - t_lon_deg
    sse_ref[...] += (jnp.sum(d_lat * d_lat, keepdims=True)
                     + jnp.sum(d_lon * d_lon, keepdims=True))

    # ---- Haversine partial: sum of central angles c (3 cos + 2 sqrt + atan2) ----
    rad = jnp.float32(DEG2RAD)
    dlat = (t_lat_deg - p_lat_deg) * rad
    dlon = (t_lon_deg - p_lon_deg) * rad
    slat = (t_lat_deg + p_lat_deg) * rad
    cos_dlat = jnp.cos(dlat)
    cos_dlon = jnp.cos(dlon)
    cos_slat = jnp.cos(slat)
    # a = sin^2(dlat/2) + cos(p_lat)*cos(t_lat)*sin^2(dlon/2)
    a = 0.5 * (1.0 - cos_dlat) + 0.25 * (cos_dlat + cos_slat) * (1.0 - cos_dlon)
    a = jnp.clip(a, 0.0, 1.0)                      # guard fp rounding
    c = 2.0 * jnp.arctan2(jnp.sqrt(a), jnp.sqrt(1.0 - a))   # == 2*asin(sqrt(a))
    csum_ref[...] += jnp.sum(c, keepdims=True)


def _lane_dense(x, rows_padded):
    """(N, 2) -> (2, rows_padded, LANE) lane-dense slabs, zero padded."""
    n = x.shape[0]
    xt = jnp.transpose(x)                                   # (2, N)
    xt = jnp.pad(xt, ((0, 0), (0, rows_padded * LANE - n)))
    return xt.reshape(2, rows_padded, LANE)


def combined_loss(pred, target, hav_weight=HAV_WEIGHT, max_tile_rows=512):
    """Returns (loss, mse, hav) exactly like the PyTorch CombinedLoss.forward."""
    pred = jnp.asarray(pred, jnp.float32)
    target = jnp.asarray(target, jnp.float32)
    n, ncol = pred.shape
    assert ncol == 2 and target.shape == pred.shape, "expected (N, 2) [lat, lon]"

    # ---- static tiling arithmetic ----
    max_tile_rows = max(8, (int(max_tile_rows) // 8) * 8)
    rows = -(-n // LANE)                                 # rows of 128 lanes
    tile_rows = min(max_tile_rows, -(-rows // 8) * 8)    # multiple of 8
    total_tiles = -(-rows // tile_rows)
    n_splits = 2 if total_tiles >= 2 else 1              # 2-TC sharding (v7x)
    total_tiles = -(-total_tiles // n_splits) * n_splits
    tiles_per_split = total_tiles // n_splits
    rows_padded = total_tiles * tile_rows
    padded_n = rows_padded * LANE

    pred_l = _lane_dense(pred, rows_padded)
    tgt_l = _lane_dense(target, rows_padded)

    cost = pl.CostEstimate(
        flops=20 * padded_n,
        transcendentals=6 * padded_n,          # 3 cos + 2 sqrt + 1 atan2 / elem
        bytes_accessed=4 * 4 * padded_n,       # 4 f32 streams in
    )

    sse_parts, csum_parts = pl.pallas_call(
        _combined_loss_kernel,
        out_shape=(
            jax.ShapeDtypeStruct((n_splits, 8, LANE), jnp.float32),
            jax.ShapeDtypeStruct((n_splits, 8, LANE), jnp.float32),
        ),
        grid=(n_splits, tiles_per_split),
        in_specs=[
            pl.BlockSpec((2, tile_rows, LANE),
                         lambda s, i: (0, s * tiles_per_split + i, 0)),
            pl.BlockSpec((2, tile_rows, LANE),
                         lambda s, i: (0, s * tiles_per_split + i, 0)),
        ],
        out_specs=(
            pl.BlockSpec((1, 8, LANE), lambda s, i: (s, 0, 0)),
            pl.BlockSpec((1, 8, LANE), lambda s, i: (s, 0, 0)),
        ),
        compiler_params=pltpu.CompilerParams(
            dimension_semantics=("parallel", "arbitrary")),
        cost_estimate=cost,
    )(pred_l, tgt_l)

    # ---- tiny scalar tail: divide by the TRUE n, combine ----
    sse = jnp.sum(sse_parts[:, 0, 0])
    csum = jnp.sum(csum_parts[:, 0, 0])
    mse = sse / jnp.float32(n * 2)
    hav = csum * jnp.float32(EARTH_RADIUS_KM) / jnp.float32(n)
    loss = (1.0 - hav_weight) * mse + hav_weight * hav
    return loss, mse, hav


def _reference(pred, target, hav_weight=HAV_WEIGHT):
    """Pure-JAX mirror of the PyTorch module (for sanity checking)."""
    pred = pred.astype(jnp.float32)
    target = target.astype(jnp.float32)
    mse = jnp.mean((pred - target) ** 2)
    p_lat = pred[:, 0] * DEG2RAD
    p_lon = pred[:, 1] * DEG2RAD
    t_lat = target[:, 0] * DEG2RAD
    t_lon = target[:, 1] * DEG2RAD
    dlon = t_lon - p_lon
    dlat = t_lat - p_lat
    a = jnp.sin(dlat / 2) ** 2 + jnp.cos(p_lat) * jnp.cos(t_lat) * jnp.sin(dlon / 2) ** 2
    c = 2 * jnp.arcsin(jnp.sqrt(a))
    hav = jnp.mean(c * EARTH_RADIUS_KM)
    loss = (1 - hav_weight) * mse + hav_weight * hav
    return loss, mse, hav


if __name__ == "__main__":
    key = jax.random.PRNGKey(0)
    k1, k2, k3, k4 = jax.random.split(key, 4)

    def make_inputs(n):
        pred = jnp.stack(
            [jax.random.uniform(k1, (n,), jnp.float32, -90.0, 90.0),     # lat deg
             jax.random.uniform(k2, (n,), jnp.float32, -180.0, 180.0)],  # lon deg
            axis=1)
        target = pred + jnp.stack(
            [jax.random.uniform(k3, (n,), jnp.float32, -5.0, 5.0),
             jax.random.uniform(k4, (n,), jnp.float32, -5.0, 5.0)],
            axis=1)
        return pred, target

    # Small batch, not a multiple of 128: single tile, exercises zero padding.
    pred, target = make_inputs(1000)
    out = jax.block_until_ready(combined_loss(pred, target))
    ref = jax.block_until_ready(_reference(pred, target))
    for a, b in zip(out, ref):
        np.testing.assert_allclose(np.asarray(a), np.asarray(b), rtol=1e-3, atol=1e-3)

    # Same math with tiny tiles: exercises the (parallel, arbitrary) grid,
    # the pl.when accumulator init, and the 2-way core split path.
    pred2, target2 = make_inputs(4096)
    out2 = jax.block_until_ready(combined_loss(pred2, target2, max_tile_rows=8))
    ref2 = jax.block_until_ready(_reference(pred2, target2))
    for a, b in zip(out2, ref2):
        np.testing.assert_allclose(np.asarray(a), np.asarray(b), rtol=1e-3, atol=1e-3)

    print("KERNEL_OK")
</pallas_src>

<mosaic_0001>
module attributes {stable_mosaic.version = 11 : i64} {
  func.func @_combined_loss_kernel(%arg0: i32, %arg1: i32, %arg2: memref<2x8x128xf32, #tpu.memory_space<vmem>>, %arg3: memref<2x8x128xf32, #tpu.memory_space<vmem>>, %arg4: memref<1x8x128xf32, #tpu.memory_space<vmem>>, %arg5: memref<1x8x128xf32, #tpu.memory_space<vmem>>) attributes {dimension_semantics = [#tpu.dimension_semantics<parallel>, #tpu.dimension_semantics<arbitrary>], iteration_bounds = array<i64: 1, 1>, scalar_prefetch = 0 : i64, scratch_operands = 0 : i64, tpu.core_type = #tpu.core_type<tc>, window_params = [{transform_indices = @transform_0, window_bounds = array<i64: 2, 8, 128>}, {transform_indices = @transform_1, window_bounds = array<i64: 2, 8, 128>}, {transform_indices = @transform_2, window_bounds = array<i64: 1, 8, 128>}, {transform_indices = @transform_3, window_bounds = array<i64: 1, 8, 128>}]} {
    %c0_i32 = arith.constant 0 : i32
    %0 = arith.cmpi eq, %arg1, %c0_i32 : i32
    %1 = arith.extui %0 : i1 to i32
    %c0_i32_0 = arith.constant 0 : i32
    %2 = arith.cmpi ne, %1, %c0_i32_0 : i32
    scf.if %2 {
      %cst_36 = arith.constant 0.000000e+00 : f32
      %75 = vector.broadcast %cst_36 : f32 to vector<1x8x128xf32>
      %c0_37 = arith.constant 0 : index
      %c0_38 = arith.constant 0 : index
      %c0_39 = arith.constant 0 : index
      %76 = vector.load %arg4[%c0_37, %c0_38, %c0_39] : memref<1x8x128xf32, #tpu.memory_space<vmem>>, vector<1x8x128xf32>
      tpu.vector_store %arg4[%c0_37, %c0_38, %c0_39], %75 {strides = array<i32>} : memref<1x8x128xf32, #tpu.memory_space<vmem>>, vector<1x8x128xf32>,
      %cst_40 = arith.constant 0.000000e+00 : f32
      %77 = vector.broadcast %cst_40 : f32 to vector<1x8x128xf32>
      %c0_41 = arith.constant 0 : index
      %c0_42 = arith.constant 0 : index
      %c0_43 = arith.constant 0 : index
      %78 = vector.load %arg5[%c0_41, %c0_42, %c0_43] : memref<1x8x128xf32, #tpu.memory_space<vmem>>, vector<1x8x128xf32>
      tpu.vector_store %arg5[%c0_41, %c0_42, %c0_43], %77 {strides = array<i32>} : memref<1x8x128xf32, #tpu.memory_space<vmem>>, vector<1x8x128xf32>,
    } else {
    }
    %c0 = arith.constant 0 : index
    %c0_1 = arith.constant 0 : index
    %c0_2 = arith.constant 0 : index
    %3 = vector.load %arg2[%c0, %c0_1, %c0_2] : memref<2x8x128xf32, #tpu.memory_space<vmem>>, vector<1x8x128xf32>
    %4 = vector.shape_cast %3 : vector<1x8x128xf32> to vector<8x128xf32>
    %c1 = arith.constant 1 : index
    %c0_3 = arith.constant 0 : index
    %c0_4 = arith.constant 0 : index
    %5 = vector.load %arg2[%c1, %c0_3, %c0_4] : memref<2x8x128xf32, #tpu.memory_space<vmem>>, vector<1x8x128xf32>
    %6 = vector.shape_cast %5 : vector<1x8x128xf32> to vector<8x128xf32>
    %c0_5 = arith.constant 0 : index
    %c0_6 = arith.constant 0 : index
    %c0_7 = arith.constant 0 : index
    %7 = vector.load %arg3[%c0_5, %c0_6, %c0_7] : memref<2x8x128xf32, #tpu.memory_space<vmem>>, vector<1x8x128xf32>
    %8 = vector.shape_cast %7 : vector<1x8x128xf32> to vector<8x128xf32>
    %c1_8 = arith.constant 1 : index
    %c0_9 = arith.constant 0 : index
    %c0_10 = arith.constant 0 : index
    %9 = vector.load %arg3[%c1_8, %c0_9, %c0_10] : memref<2x8x128xf32, #tpu.memory_space<vmem>>, vector<1x8x128xf32>
    %10 = vector.shape_cast %9 : vector<1x8x128xf32> to vector<8x128xf32>
    %11 = arith.subf %4, %8 : vector<8x128xf32>
    %12 = arith.subf %6, %10 : vector<8x128xf32>
    %c0_11 = arith.constant 0 : index
    %c0_12 = arith.constant 0 : index
    %c0_13 = arith.constant 0 : index
    %13 = vector.load %arg4[%c0_11, %c0_12, %c0_13] : memref<1x8x128xf32, #tpu.memory_space<vmem>>, vector<1x8x128xf32>
    %14 = arith.mulf %11, %11 : vector<8x128xf32>
    %15 = vector.shape_cast %14 : vector<8x128xf32> to vector<1x8x128xf32>
    %cst = arith.constant dense<0.000000e+00> : vector<1xf32>
    %16 = vector.multi_reduction <add>, %15, %cst [1, 2] : vector<1x8x128xf32> to vector<1xf32>
    %17 = vector.shape_cast %16 : vector<1xf32> to vector<1x1x1xf32>
    %18 = vector.extract %17[0, 0, 0] : f32 from vector<1x1x1xf32>
    %19 = vector.broadcast %18 : f32 to vector<1x1xf32>
    %20 = arith.mulf %12, %12 : vector<8x128xf32>
    %21 = vector.shape_cast %20 : vector<8x128xf32> to vector<1x8x128xf32>
    %cst_14 = arith.constant dense<0.000000e+00> : vector<1xf32>
    %22 = vector.multi_reduction <add>, %21, %cst_14 [1, 2] : vector<1x8x128xf32> to vector<1xf32>
    %23 = vector.shape_cast %22 : vector<1xf32> to vector<1x1x1xf32>
    %24 = vector.extract %23[0, 0, 0] : f32 from vector<1x1x1xf32>
    %25 = vector.broadcast %24 : f32 to vector<1x1xf32>
    %26 = arith.addf %19, %25 : vector<1x1xf32>
    %27 = vector.shape_cast %26 : vector<1x1xf32> to vector<1x1x1xf32>
    %28 = vector.broadcast %27 : vector<1x1x1xf32> to vector<1x8x128xf32>
    %29 = arith.addf %13, %28 : vector<1x8x128xf32>
    %c0_15 = arith.constant 0 : index
    %c0_16 = arith.constant 0 : index
    %c0_17 = arith.constant 0 : index
    %30 = vector.load %arg4[%c0_15, %c0_16, %c0_17] : memref<1x8x128xf32, #tpu.memory_space<vmem>>, vector<1x8x128xf32>
    tpu.vector_store %arg4[%c0_15, %c0_16, %c0_17], %29 {strides = array<i32>} : memref<1x8x128xf32, #tpu.memory_space<vmem>>, vector<1x8x128xf32>,
    %31 = arith.subf %8, %4 : vector<8x128xf32>
    %cst_18 = arith.constant 0.0174532924 : f32
    %32 = vector.broadcast %cst_18 : f32 to vector<8x128xf32>
    %33 = arith.mulf %31, %32 : vector<8x128xf32>
    %34 = arith.subf %10, %6 : vector<8x128xf32>
    %cst_19 = arith.constant 0.0174532924 : f32
    %35 = vector.broadcast %cst_19 : f32 to vector<8x128xf32>
    %36 = arith.mulf %34, %35 : vector<8x128xf32>
    %37 = arith.addf %8, %4 : vector<8x128xf32>
    %cst_20 = arith.constant 0.0174532924 : f32
    %38 = vector.broadcast %cst_20 : f32 to vector<8x128xf32>
    %39 = arith.mulf %37, %38 : vector<8x128xf32>
    %40 = math.cos %33 : vector<8x128xf32>
    %41 = math.cos %36 : vector<8x128xf32>
    %42 = math.cos %39 : vector<8x128xf32>
    %cst_21 = arith.constant 1.000000e+00 : f32
    %43 = vector.broadcast %cst_21 : f32 to vector<8x128xf32>
    %44 = arith.subf %43, %40 : vector<8x128xf32>
    %cst_22 = arith.constant 5.000000e-01 : f32
    %45 = vector.broadcast %cst_22 : f32 to vector<8x128xf32>
    %46 = arith.mulf %45, %44 : vector<8x128xf32>
    %47 = arith.addf %40, %42 : vector<8x128xf32>
    %cst_23 = arith.constant 2.500000e-01 : f32
    %48 = vector.broadcast %cst_23 : f32 to vector<8x128xf32>
    %49 = arith.mulf %48, %47 : vector<8x128xf32>
    %cst_24 = arith.constant 1.000000e+00 : f32
    %50 = vector.broadcast %cst_24 : f32 to vector<8x128xf32>
    %51 = arith.subf %50, %41 : vector<8x128xf32>
    %52 = arith.mulf %49, %51 : vector<8x128xf32>
    %53 = arith.addf %46, %52 : vector<8x128xf32>
    %cst_25 = arith.constant 0.000000e+00 : f32
    %cst_26 = arith.constant 1.000000e+00 : f32
    %54 = vector.broadcast %cst_25 : f32 to vector<8x128xf32>
    %55 = arith.maximumf %54, %53 : vector<8x128xf32>
    %56 = vector.broadcast %cst_26 : f32 to vector<8x128xf32>
    %57 = arith.minimumf %56, %55 : vector<8x128xf32>
    %58 = math.sqrt %57 : vector<8x128xf32>
    %cst_27 = arith.constant 1.000000e+00 : f32
    %59 = vector.broadcast %cst_27 : f32 to vector<8x128xf32>
    %60 = arith.subf %59, %57 : vector<8x128xf32>
    %61 = math.sqrt %60 : vector<8x128xf32>
    %62 = math.atan2 %58, %61 : vector<8x128xf32>
    %cst_28 = arith.constant 2.000000e+00 : f32
    %63 = vector.broadcast %cst_28 : f32 to vector<8x128xf32>
    %64 = arith.mulf %63, %62 : vector<8x128xf32>
    %c0_29 = arith.constant 0 : index
    %c0_30 = arith.constant 0 : index
    %c0_31 = arith.constant 0 : index
    %65 = vector.load %arg5[%c0_29, %c0_30, %c0_31] : memref<1x8x128xf32, #tpu.memory_space<vmem>>, vector<1x8x128xf32>
    %66 = vector.shape_cast %64 : vector<8x128xf32> to vector<1x8x128xf32>
    %cst_32 = arith.constant dense<0.000000e+00> : vector<1xf32>
    %67 = vector.multi_reduction <add>, %66, %cst_32 [1, 2] : vector<1x8x128xf32> to vector<1xf32>
    %68 = vector.shape_cast %67 : vector<1xf32> to vector<1x1x1xf32>
    %69 = vector.extract %68[0, 0, 0] : f32 from vector<1x1x1xf32>
    %70 = vector.broadcast %69 : f32 to vector<1x1xf32>
    %71 = vector.shape_cast %70 : vector<1x1xf32> to vector<1x1x1xf32>
    %72 = vector.broadcast %71 : vector<1x1x1xf32> to vector<1x8x128xf32>
    %73 = arith.addf %65, %72 : vector<1x8x128xf32>
    %c0_33 = arith.constant 0 : index
    %c0_34 = arith.constant 0 : index
    %c0_35 = arith.constant 0 : index
    %74 = vector.load %arg5[%c0_33, %c0_34, %c0_35] : memref<1x8x128xf32, #tpu.memory_space<vmem>>, vector<1x8x128xf32>
    tpu.vector_store %arg5[%c0_33, %c0_34, %c0_35], %73 {strides = array<i32>} : memref<1x8x128xf32, #tpu.memory_space<vmem>>, vector<1x8x128xf32>,
    return
  }
  func.func @transform_0(%arg0: i32, %arg1: i32) -> (i32, i32, i32) {
    %c1_i32 = arith.constant 1 : i32
    %0 = arith.muli %arg0, %c1_i32 : i32
    %1 = arith.addi %0, %arg1 : i32
    %c0_i32 = arith.constant 0 : i32
    %c0_i32_0 = arith.constant 0 : i32
    %c0_i32_1 = arith.constant 0 : i32
    return %c0_i32, %1, %c0_i32_0 : i32, i32, i32
  }
  func.func @transform_1(%arg0: i32, %arg1: i32) -> (i32, i32, i32) {
    %c1_i32 = arith.constant 1 : i32
    %0 = arith.muli %arg0, %c1_i32 : i32
    %1 = arith.addi %0, %arg1 : i32
    %c0_i32 = arith.constant 0 : i32
    %c0_i32_0 = arith.constant 0 : i32
    %c0_i32_1 = arith.constant 0 : i32
    return %c0_i32, %1, %c0_i32_0 : i32, i32, i32
  }
  func.func @transform_2(%arg0: i32, %arg1: i32) -> (i32, i32, i32) {
    %c0_i32 = arith.constant 0 : i32
    %c0_i32_0 = arith.constant 0 : i32
    %c0_i32_1 = arith.constant 0 : i32
    return %arg0, %c0_i32, %c0_i32_0 : i32, i32, i32
  }
  func.func @transform_3(%arg0: i32, %arg1: i32) -> (i32, i32, i32) {
    %c0_i32 = arith.constant 0 : i32
    %c0_i32_0 = arith.constant 0 : i32
    %c0_i32_1 = arith.constant 0 : i32
    return %arg0, %c0_i32, %c0_i32_0 : i32, i32, i32
  }
}

</mosaic_0001>

<llo_original>
// kernel: tpu_custom_call.1
$region0: #{tpu_custom_call.1}
  #allocation0 [shape = 'u32[]', space=smem, size = 0x4, offset = 0x4, fixed_abs, tag = 'smem constant byte address 0x4 - core index']
  #allocation1 [shape = 'u32[72,128]{1,0:T(1,128)}', space=vmem, size = 0x9000, scoped, tag = 'internal scratch']
  %s0 = inlined_call_operand.hbm [shape: f32[2,8,128], index: 0, kind: input, shape index: {}]
  %s1 = inlined_call_operand.hbm [shape: f32[2,8,128], index: 1, kind: input, shape index: {}]
  %s2 = inlined_call_operand.hbm [shape: f32[1,8,128], index: 2, kind: output, shape index: {0}]
  %s3 = inlined_call_operand.hbm [shape: f32[1,8,128], index: 3, kind: output, shape index: {1}]
  %4 = xla_tuple %s2, %s3
  %s5 = sld [smem:[#allocation0]]
  $region38: #{tpu_custom_call.1} parent=0
    _
  %s7 = ssub.s32 1, %s5
  %s8 = scalar_select 0, %s7, %s5
  $region1: #{tpu_custom_call.1} parent=0
    #allocation2 [shape = 'u8[8192]{0}', space=vmem, size = 0x2000, scoped, tag = 'input window, operand 0, single buffered']
    #allocation3 [shape = 's32[1]{0}', space=sflag, size = 0x4, scoped, tag = 'scoped memory for tpu_custom_call.1']
    #allocation4 [shape = 's32[1]{0}', space=sflag, size = 0x4, scoped, tag = 'scoped memory for tpu_custom_call.1']
    #allocation5 [shape = 'u8[8192]{0}', space=vmem, size = 0x2000, scoped, tag = 'input window, operand 1, single buffered']
    #allocation6 [shape = 's32[1]{0}', space=sflag, size = 0x4, scoped, tag = 'scoped memory for tpu_custom_call.1']
    #allocation7 [shape = 'u8[4096]{0}', space=vmem, size = 0x1000, scoped, tag = 'output window, operand 0, single buffered']
    #allocation8 [shape = 'u8[4096]{0}', space=vmem, size = 0x1000, scoped, tag = 'output window, operand 1, single buffered']
    #allocation9 [shape = 's32[1]{0}', space=sflag, size = 0x4, scoped, tag = 'scoped memory for tpu_custom_call.1']
    %9 = vsyncpa [#allocation3], 0
    %10 = vsyncpa [#allocation6], 0
    %11 = vsyncpa [#allocation4], 0
    %12 = vsyncpa [#allocation9], 0
    // Predicated region
    $region2: #{tpu_custom_call.1} parent=1 // pred_check
      _
    $region3: #{tpu_custom_call.1} parent=1 // pred_check_branch
      %14 = sbr.rel (0) target = $region5
    $region4: #{tpu_custom_call.1} parent=1 // pred_region
      %s15 = sadd.s32 0, 0
      %17 = vsyncadd [#allocation3], 0
      %s18 = smul.addr %s15, 8
      %s19 = scalar_lea.hbm %s0, %s18
      %s20 = sshll.u32 %s19, 4
      %s21 = int_to_ptr.hbm [resolvable:$true] %s20
      %s22 = sshll.u32 [#allocation2], 4
      %s23 = int_to_ptr.vmem [resolvable:$true] %s22
      %28 = dma.hbm_to_vmem [thread:$0]  %s21, 256, %s23, [#allocation3], 128, 128, 8
    $region5: #{tpu_custom_call.1} parent=1 // pred_fallthru
      _
    // Predicated region
    $region6: #{tpu_custom_call.1} parent=1 // pred_check
      _
    $region7: #{tpu_custom_call.1} parent=1 // pred_check_branch
      %30 = sbr.rel (0) target = $region9
    $region8: #{tpu_custom_call.1} parent=1 // pred_region
      %s31 = sadd.s32 0, 0
      %33 = vsyncadd [#allocation6], 0
      %s34 = smul.addr %s31, 8
      %s35 = scalar_lea.hbm %s1, %s34
      %s36 = sshll.u32 %s35, 4
      %s37 = int_to_ptr.hbm [resolvable:$true] %s36
      %s38 = sshll.u32 [#allocation5], 4
      %s39 = int_to_ptr.vmem [resolvable:$true] %s38
      %44 = dma.hbm_to_vmem [thread:$0]  %s37, 256, %s39, [#allocation6], 128, 128, 8
    $region9: #{tpu_custom_call.1} parent=1 // pred_fallthru
      _
    // Predicated region
    $region10: #{tpu_custom_call.1} parent=1 // pred_check
      _
    $region11: #{tpu_custom_call.1} parent=1 // pred_check_branch
      %46 = sbr.rel (0) target = $region13
    $region12: #{tpu_custom_call.1} parent=1 // pred_region
      %48 = dma.done [#allocation3], 256
    $region13: #{tpu_custom_call.1} parent=1 // pred_fallthru
      _
    // Predicated region
    $region14: #{tpu_custom_call.1} parent=1 // pred_check
      _
    $region15: #{tpu_custom_call.1} parent=1 // pred_check_branch
      %50 = sbr.rel (0) target = $region17
    $region16: #{tpu_custom_call.1} parent=1 // pred_region
      %52 = dma.done [#allocation6], 256
    $region17: #{tpu_custom_call.1} parent=1 // pred_fallthru
      _
    %s53 = sadd.s32 0, 0
    %s54 = sadd.s32 0, 0
    %p55 = scmp.eq.s32.totalorder 0, 0
    // Predicated region
    $region18: #{tpu_custom_call.1} parent=1 // pred_check
      %p56 = pneg %p55
    $region19: #{tpu_custom_call.1} parent=1 // pred_check_branch
      %58 = sbr.rel (%p56) target = $region21
    $region20: #{tpu_custom_call.1} parent=1 // pred_region
      %59 = vst [vmem:[#allocation7] sm:$0xff] 0.0
      %60 = vst [vmem:[#allocation8] sm:$0xff] 0.0
    $region21: #{tpu_custom_call.1} parent=1 // pred_fallthru
      _
    %v61 = vld [vmem:[#allocation2] sm:$0xff]
    %s62 = scalar_lea.vmem [#allocation2], 8
    %v63 = vld [vmem:[%s62] sm:$0xff]
    %v64 = vld [vmem:[#allocation5] sm:$0xff]
    %s65 = scalar_lea.vmem [#allocation5], 8
    %v66 = vld [vmem:[%s65] sm:$0xff]
    %v67 = vsub.f32 %v61, %v64
    %v68 = vsub.f32 %v63, %v66
    %v69 = vld [vmem:[#allocation7] sm:$0xff]
    %v70 = vmul.f32 %v67, %v67
    %71 = vadd.xlane.f32.xlu0 %v70
    %v72 = vpop.xlane.xlu0 %71
    %v73 = vrot.slane %v72, 4
    %v74 = vadd.f32 %v72, %v73
    %v75 = vrot.slane %v74, 2
    %v76 = vadd.f32 %v74, %v75
    %v77 = vrot.slane %v76, 1
    %v78 = vadd.f32 %v76, %v77
    %s79 = vtos %v78
    %v80 = vstv %s79
    %v81 = vmul.f32 %v68, %v68
    %82 = vadd.xlane.f32.xlu0 %v81
    %v83 = vpop.xlane.xlu0 %82
    %v84 = vrot.slane %v83, 4
    %v85 = vadd.f32 %v83, %v84
    %v86 = vrot.slane %v85, 2
    %v87 = vadd.f32 %v85, %v86
    %v88 = vrot.slane %v87, 1
    %v89 = vadd.f32 %v87, %v88
    %s90 = vtos %v89
    %v91 = vstv %s90
    %v92 = vadd.f32 %v80, %v91
    %v93 = vadd.f32 %v69, %v92
    %94 = vst [vmem:[#allocation7] sm:$0xff] %v93
    %v95 = vsub.f32 %v64, %v61
    %v96 = vmul.f32 %v95, 0.017453292
    %v97 = vsub.f32 %v66, %v63
    %v98 = vmul.f32 %v97, 0.017453292
    %v99 = vadd.f32 %v64, %v61
    %v100 = vmul.f32 %v99, 0.017453292
    %v101 = vand.u32 2147483647, %v96
    %vm102 = vcmp.le.f32.partialorder %v101, 0.7853982
    %vm103 = vcmp.lt.s32.totalorder %v96, 0
    %v104 = vand.u32 %v96, 2139095040
    %v105 = vshrl.u32 %v104, 23
    %v106 = vsub.s32 %v105, 127
    %v107 = vand.u32 2147483647, %v96
    %v108 = vand.u32 %v107, 8388607
    %v109 = vor.u32 %v108, 8388608
    %v110 = vsub.s32 0, %v109
    %v111 = vadd.s32 %v106, 1
    %vm112 = vcmp.gt.s32.totalorder %v111, 0
    %v113 = vsel %vm112, %v111, 0
    %v114 = vshrl.u32 %v113, 5
    %v115 = vand.u32 %v113, 31
    %v116 = vsub.s32 32, %v115
    %v117 = vshrl.u32 683565275, %v116
    %v118 = vshll.u32 683565275, %v115
    %v119 = vshrl.u32 2475754826, %v116
    %v120 = vor.u32 %v118, %v119
    %v121 = vshll.u32 2475754826, %v115
    %v122 = vshrl.u32 2131351028, %v116
    %v123 = vor.u32 %v121, %v122
    %v124 = vshll.u32 2131351028, %v115
    %v125 = vshrl.u32 2102212464, %v116
    %v126 = vor.u32 %v124, %v125
    %v127 = vshll.u32 2102212464, %v115
    %v128 = vshrl.u32 920167782, %v116
    %v129 = vor.u32 %v127, %v128
    %v130 = vshll.u32 920167782, %v115
    %v131 = vshrl.u32 1326507024, %v116
    %v132 = vor.u32 %v130, %v131
    %vm133 = vcmp.lt.s32.totalorder %v114, 1
    %vm134 = vcmp.lt.s32.totalorder %v114, 2
    %vm135 = vcmp.lt.s32.totalorder %v114, 3
    %vm136 = vcmp.lt.s32.totalorder %v114, 4
    %v137 = vsel %vm133, %v117, %v120
    %v138 = vsel %vm136, %v126, 2102212464
    %v139 = vsel %vm135, %v123, %v138
    %v140 = vsel %vm134, %v137, %v139
    %v141 = vsel %vm133, %v120, %v123
    %v142 = vsel %vm136, %v129, 920167782
    %v143 = vsel %vm135, %v126, %v142
    %v144 = vsel %vm134, %v141, %v143
    %v145 = vsel %vm133, %v123, %v126
    %v146 = vsel %vm136, %v132, 1326507024
    %v147 = vsel %vm135, %v129, %v146
    %v148 = vsel %vm134, %v145, %v147
    %v149 = vshll.u32 %v109, 8
    %v150 = vand.u32 %v149, 65535
    %v151 = vshrl.u32 %v149, 16
    %v152 = vand.u32 %v148, 65535
    %v153 = vshrl.u32 %v148, 16
    %v154 = vmul.u32 %v150, %v152
    %v155 = vmul.u32 %v150, %v153
    %v156 = vmul.u32 %v151, %v152
    %v157 = vmul.u32 %v151, %v153
    %v158 = vshll.u32 %v155, 16
    %v159 = vshrl.u32 %v155, 16
    %v160 = vshll.u32 %v156, 16
    %v161 = vshrl.u32 %v156, 16
    %vm162 = vc.u32 %v154, %v158
    %v163 = vsel %vm162, 1, 0
    %v164 = vadd.s32 %v154, %v158
    %v165 = vadd.s32 %v157, %v163
    %vm166 = vc.u32 %v164, %v160
    %v167 = vsel %vm166, 1, 0
    %v168 = vadd.s32 %v164, %v160
    %v169 = vadd.s32 %v165, %v167
    %v170 = vadd.s32 %v169, %v159
    %v171 = vadd.s32 %v170, %v161
    %v172 = vand.u32 %v149, 65535
    %v173 = vshrl.u32 %v149, 16
    %v174 = vand.u32 %v144, 65535
    %v175 = vshrl.u32 %v144, 16
    %v176 = vmul.u32 %v172, %v174
    %v177 = vmul.u32 %v172, %v175
    %v178 = vmul.u32 %v173, %v174
    %v179 = vmul.u32 %v173, %v175
    %v180 = vshll.u32 %v177, 16
    %v181 = vshrl.u32 %v177, 16
    %v182 = vshll.u32 %v178, 16
    %v183 = vshrl.u32 %v178, 16
    %vm184 = vc.u32 %v176, %v180
    %v185 = vsel %vm184, 1, 0
    %v186 = vadd.s32 %v176, %v180
    %v187 = vadd.s32 %v179, %v185
    %vm188 = vc.u32 %v186, %v182
    %v189 = vsel %vm188, 1, 0
    %v190 = vadd.s32 %v186, %v182
    %v191 = vadd.s32 %v187, %v189
    %v192 = vadd.s32 %v191, %v181
    %v193 = vadd.s32 %v192, %v183
    %v194 = vmul.u32 %v149, %v140
    %v195 = vadd.s32 %v171, %v190
    %vm196 = vc.u32 %v171, %v190
    %v197 = vadd.s32 %v193, 1
    %v198 = vsel %vm196, %v197, %v193
    %v199 = vadd.s32 %v194, %v198
    %v200 = vadd.s32 %v199, 536870912
    %v201 = vshrl.u32 %v200, 30
    %v202 = vshll.u32 %v201, 30
    %v203 = vsub.s32 %v199, %v202
    %vm204 = vcmp.lt.s32.totalorder %v203, 0
    %v205 = vsub.s32 0, %v203
    %v206 = vsel %vm204, %v205, %v203
    %v207 = vclz %v206
    %v208 = vsub.s32 %v207, 2
    %vm209 = vcmp.gt.s32.totalorder 0, %v208
    %v210 = vsel %vm209, 0, %v208
    %v211 = vsub.s32 32, %v210
    %v212 = vshll.u32 %v203, %v210
    %v213 = vshrl.u32 %v195, %v211
    %v214 = vor.u32 %v212, %v213
    %v215 = vsub.s32 4294967266, %v210
    %v216 = vadd.s32 %v215, 127
    %v217 = vshll.u32 %v216, 23
    %v218 = vor.u32 4788187, %v217
    %v219 = vand.u32 2147483647, %v218
    %v221 = vcvt.s32.f32 %v214
    %v222 = vmul.f32 %v221, %v219
    %v223 = vxor.u32 %v222, 2147483648
    %v224 = vsel %vm103, %v223, %v222
    %v225 = vsub.s32 4, %v201
    %v226 = vsel %vm103, %v225, %v201
    %v227 = vsel %vm102, %v96, %v224
    %v228 = vsel %vm102, 0, %v226
    %v229 = vmul.f32 %v227, %v227
    %v230 = vmul.f32 %v229, -0.001358992
    %v231 = vadd.f32 %v230, 0.041655596
    %v232 = vmul.f32 %v229, %v231
    %v233 = vadd.f32 %v232, -0.4999988
    %v234 = vmul.f32 %v229, %v233
    %v235 = vadd.f32 1.0, %v234
    %v236 = vmul.f32 %v227, %v227
    %v237 = vmul.f32 %v236, -0.00019511016
    %v238 = vadd.f32 %v237, 0.008332121
    %v239 = vmul.f32 %v236, %v238
    %v240 = vadd.f32 %v239, -0.16666654
    %v241 = vmul.f32 %v236, %v240
    %v242 = vadd.f32 %v241, 1.0
    %v243 = vmul.f32 %v242, %v227
    %vm244 = vweird.f32 %v96
    %v245 = vand.u32 %v228, 3
    %vm246 = vcmp.lt.s32.totalorder %v245, 2
    %vm247 = vcmp.eq.s32.totalorder %v245, 0
    %v248 = vxor.u32 %v243, 2147483648
    %v249 = vsel %vm247, %v235, %v248
    %vm250 = vcmp.eq.s32.totalorder %v245, 2
    %v251 = vxor.u32 %v235, 2147483648
    %v252 = vsel %vm250, %v251, %v243
    %v253 = vsel %vm246, %v249, %v252
    %v254 = vsel %vm244, nan, %v253
    %v255 = vand.u32 2147483647, %v98
    %vm256 = vcmp.le.f32.partialorder %v255, 0.7853982
    %vm257 = vcmp.lt.s32.totalorder %v98, 0
    %v258 = vand.u32 %v98, 2139095040
    %v259 = vshrl.u32 %v258, 23
    %v260 = vsub.s32 %v259, 127
    %v261 = vand.u32 2147483647, %v98
    %v262 = vand.u32 %v261, 8388607
    %v263 = vor.u32 %v262, 8388608
    %v264 = vsub.s32 0, %v263
    %v265 = vadd.s32 %v260, 1
    %vm266 = vcmp.gt.s32.totalorder %v265, 0
    %v267 = vsel %vm266, %v265, 0
    %v268 = vshrl.u32 %v267, 5
    %v269 = vand.u32 %v267, 31
    %v270 = vsub.s32 32, %v269
    %v271 = vshrl.u32 683565275, %v270
    %v272 = vshll.u32 683565275, %v269
    %v273 = vshrl.u32 2475754826, %v270
    %v274 = vor.u32 %v272, %v273
    %v275 = vshll.u32 2475754826, %v269
    %v276 = vshrl.u32 2131351028, %v270
    %v277 = vor.u32 %v275, %v276
    %v278 = vshll.u32 2131351028, %v269
    %v279 = vshrl.u32 2102212464, %v270
    %v280 = vor.u32 %v278, %v279
    %v281 = vshll.u32 2102212464, %v269
    %v282 = vshrl.u32 920167782, %v270
    %v283 = vor.u32 %v281, %v282
    %v284 = vshll.u32 920167782, %v269
    %v285 = vshrl.u32 1326507024, %v270
    %v286 = vor.u32 %v284, %v285
    %vm287 = vcmp.lt.s32.totalorder %v268, 1
    %vm288 = vcmp.lt.s32.totalorder %v268, 2
    %vm289 = vcmp.lt.s32.totalorder %v268, 3
    %vm290 = vcmp.lt.s32.totalorder %v268, 4
    %v291 = vsel %vm287, %v271, %v274
    %v292 = vsel %vm290, %v280, 2102212464
    %v293 = vsel %vm289, %v277, %v292
    %v294 = vsel %vm288, %v291, %v293
    %v295 = vsel %vm287, %v274, %v277
    %v296 = vsel %vm290, %v283, 920167782
    %v297 = vsel %vm289, %v280, %v296
    %v298 = vsel %vm288, %v295, %v297
    %v299 = vsel %vm287, %v277, %v280
    %v300 = vsel %vm290, %v286, 1326507024
    %v301 = vsel %vm289, %v283, %v300
    %v302 = vsel %vm288, %v299, %v301
    %v303 = vshll.u32 %v263, 8
    %v304 = vand.u32 %v303, 65535
    %v305 = vshrl.u32 %v303, 16
    %v306 = vand.u32 %v302, 65535
    %v307 = vshrl.u32 %v302, 16
    %v308 = vmul.u32 %v304, %v306
    %v309 = vmul.u32 %v304, %v307
    %v310 = vmul.u32 %v305, %v306
    %v311 = vmul.u32 %v305, %v307
    %v312 = vshll.u32 %v309, 16
    %v313 = vshrl.u32 %v309, 16
    %v314 = vshll.u32 %v310, 16
    %v315 = vshrl.u32 %v310, 16
    %vm316 = vc.u32 %v308, %v312
    %v317 = vsel %vm316, 1, 0
    %v318 = vadd.s32 %v308, %v312
    %v319 = vadd.s32 %v311, %v317
    %vm320 = vc.u32 %v318, %v314
    %v321 = vsel %vm320, 1, 0
    %v322 = vadd.s32 %v318, %v314
    %v323 = vadd.s32 %v319, %v321
    %v324 = vadd.s32 %v323, %v313
    %v325 = vadd.s32 %v324, %v315
    %v326 = vand.u32 %v303, 65535
    %v327 = vshrl.u32 %v303, 16
    %v328 = vand.u32 %v298, 65535
    %v329 = vshrl.u32 %v298, 16
    %v330 = vmul.u32 %v326, %v328
    %v331 = vmul.u32 %v326, %v329
    %v332 = vmul.u32 %v327, %v328
    %v333 = vmul.u32 %v327, %v329
    %v334 = vshll.u32 %v331, 16
    %v335 = vshrl.u32 %v331, 16
    %v336 = vshll.u32 %v332, 16
    %v337 = vshrl.u32 %v332, 16
    %vm338 = vc.u32 %v330, %v334
    %v339 = vsel %vm338, 1, 0
    %v340 = vadd.s32 %v330, %v334
    %v341 = vadd.s32 %v333, %v339
    %vm342 = vc.u32 %v340, %v336
    %v343 = vsel %vm342, 1, 0
    %v344 = vadd.s32 %v340, %v336
    %v345 = vadd.s32 %v341, %v343
    %v346 = vadd.s32 %v345, %v335
    %v347 = vadd.s32 %v346, %v337
    %v348 = vmul.u32 %v303, %v294
    %v349 = vadd.s32 %v325, %v344
    %vm350 = vc.u32 %v325, %v344
    %v351 = vadd.s32 %v347, 1
    %v352 = vsel %vm350, %v351, %v347
    %v353 = vadd.s32 %v348, %v352
    %v354 = vadd.s32 %v353, 536870912
    %v355 = vshrl.u32 %v354, 30
    %v356 = vshll.u32 %v355, 30
    %v357 = vsub.s32 %v353, %v356
    %vm358 = vcmp.lt.s32.totalorder %v357, 0
    %v359 = vsub.s32 0, %v357
    %v360 = vsel %vm358, %v359, %v357
    %v361 = vclz %v360
    %v362 = vsub.s32 %v361, 2
    %vm363 = vcmp.gt.s32.totalorder 0, %v362
    %v364 = vsel %vm363, 0, %v362
    %v365 = vsub.s32 32, %v364
    %v366 = vshll.u32 %v357, %v364
    %v367 = vshrl.u32 %v349, %v365
    %v368 = vor.u32 %v366, %v367
    %v369 = vsub.s32 4294967266, %v364
    %v370 = vadd.s32 %v369, 127
    %v371 = vshll.u32 %v370, 23
    %v372 = vor.u32 4788187, %v371
    %v373 = vand.u32 2147483647, %v372
    %v375 = vcvt.s32.f32 %v368
    %v376 = vmul.f32 %v375, %v373
    %v377 = vxor.u32 %v376, 2147483648
    %v378 = vsel %vm257, %v377, %v376
    %v379 = vsub.s32 4, %v355
    %v380 = vsel %vm257, %v379, %v355
    %v381 = vsel %vm256, %v98, %v378
    %v382 = vsel %vm256, 0, %v380
    %v383 = vmul.f32 %v381, %v381
    %v384 = vmul.f32 %v383, -0.001358992
    %v385 = vadd.f32 %v384, 0.041655596
    %v386 = vmul.f32 %v383, %v385
    %v387 = vadd.f32 %v386, -0.4999988
    %v388 = vmul.f32 %v383, %v387
    %v389 = vadd.f32 1.0, %v388
    %v390 = vmul.f32 %v381, %v381
    %v391 = vmul.f32 %v390, -0.00019511016
    %v392 = vadd.f32 %v391, 0.008332121
    %v393 = vmul.f32 %v390, %v392
    %v394 = vadd.f32 %v393, -0.16666654
    %v395 = vmul.f32 %v390, %v394
    %v396 = vadd.f32 %v395, 1.0
    %v397 = vmul.f32 %v396, %v381
    %vm398 = vweird.f32 %v98
    %v399 = vand.u32 %v382, 3
    %vm400 = vcmp.lt.s32.totalorder %v399, 2
    %vm401 = vcmp.eq.s32.totalorder %v399, 0
    %v402 = vxor.u32 %v397, 2147483648
    %v403 = vsel %vm401, %v389, %v402
    %vm404 = vcmp.eq.s32.totalorder %v399, 2
    %v405 = vxor.u32 %v389, 2147483648
    %v406 = vsel %vm404, %v405, %v397
    %v407 = vsel %vm400, %v403, %v406
    %v408 = vsel %vm398, nan, %v407
    %v409 = vand.u32 2147483647, %v100
    %vm410 = vcmp.le.f32.partialorder %v409, 0.7853982
    %vm411 = vcmp.lt.s32.totalorder %v100, 0
    %v412 = vand.u32 %v100, 2139095040
    %v413 = vshrl.u32 %v412, 23
    %v414 = vsub.s32 %v413, 127
    %v415 = vand.u32 2147483647, %v100
    %v416 = vand.u32 %v415, 8388607
    %v417 = vor.u32 %v416, 8388608
    %v418 = vsub.s32 0, %v417
    %v419 = vadd.s32 %v414, 1
    %vm420 = vcmp.gt.s32.totalorder %v419, 0
    %v421 = vsel %vm420, %v419, 0
    %v422 = vshrl.u32 %v421, 5
    %v423 = vand.u32 %v421, 31
    %v424 = vsub.s32 32, %v423
    %v425 = vshrl.u32 683565275, %v424
    %v426 = vshll.u32 683565275, %v423
    %v427 = vshrl.u32 2475754826, %v424
    %v428 = vor.u32 %v426, %v427
    %v429 = vshll.u32 2475754826, %v423
    %v430 = vshrl.u32 2131351028, %v424
    %v431 = vor.u32 %v429, %v430
    %v432 = vshll.u32 2131351028, %v423
    %v433 = vshrl.u32 2102212464, %v424
    %v434 = vor.u32 %v432, %v433
    %v435 = vshll.u32 2102212464, %v423
    %v436 = vshrl.u32 920167782, %v424
    %v437 = vor.u32 %v435, %v436
    %v438 = vshll.u32 920167782, %v423
    %v439 = vshrl.u32 1326507024, %v424
    %v440 = vor.u32 %v438, %v439
    %vm441 = vcmp.lt.s32.totalorder %v422, 1
    %vm442 = vcmp.lt.s32.totalorder %v422, 2
    %vm443 = vcmp.lt.s32.totalorder %v422, 3
    %vm444 = vcmp.lt.s32.totalorder %v422, 4
    %v445 = vsel %vm441, %v425, %v428
    %v446 = vsel %vm444, %v434, 2102212464
    %v447 = vsel %vm443, %v431, %v446
    %v448 = vsel %vm442, %v445, %v447
    %v449 = vsel %vm441, %v428, %v431
    %v450 = vsel %vm444, %v437, 920167782
    %v451 = vsel %vm443, %v434, %v450
    %v452 = vsel %vm442, %v449, %v451
    %v453 = vsel %vm441, %v431, %v434
    %v454 = vsel %vm444, %v440, 1326507024
    %v455 = vsel %vm443, %v437, %v454
    %v456 = vsel %vm442, %v453, %v455
    %v457 = vshll.u32 %v417, 8
    %v458 = vand.u32 %v457, 65535
    %v459 = vshrl.u32 %v457, 16
    %v460 = vand.u32 %v456, 65535
    %v461 = vshrl.u32 %v456, 16
    %v462 = vmul.u32 %v458, %v460
    %v463 = vmul.u32 %v458, %v461
    %v464 = vmul.u32 %v459, %v460
    %v465 = vmul.u32 %v459, %v461
    %v466 = vshll.u32 %v463, 16
    %v467 = vshrl.u32 %v463, 16
    %v468 = vshll.u32 %v464, 16
    %v469 = vshrl.u32 %v464, 16
    %vm470 = vc.u32 %v462, %v466
    %v471 = vsel %vm470, 1, 0
    %v472 = vadd.s32 %v462, %v466
    %v473 = vadd.s32 %v465, %v471
    %vm474 = vc.u32 %v472, %v468
    %v475 = vsel %vm474, 1, 0
    %v476 = vadd.s32 %v472, %v468
    %v477 = vadd.s32 %v473, %v475
    %v478 = vadd.s32 %v477, %v467
    %v479 = vadd.s32 %v478, %v469
    %v480 = vand.u32 %v457, 65535
    %v481 = vshrl.u32 %v457, 16
    %v482 = vand.u32 %v452, 65535
    %v483 = vshrl.u32 %v452, 16
    %v484 = vmul.u32 %v480, %v482
    %v485 = vmul.u32 %v480, %v483
    %v486 = vmul.u32 %v481, %v482
    %v487 = vmul.u32 %v481, %v483
    %v488 = vshll.u32 %v485, 16
    %v489 = vshrl.u32 %v485, 16
    %v490 = vshll.u32 %v486, 16
    %v491 = vshrl.u32 %v486, 16
    %vm492 = vc.u32 %v484, %v488
    %v493 = vsel %vm492, 1, 0
    %v494 = vadd.s32 %v484, %v488
    %v495 = vadd.s32 %v487, %v493
    %vm496 = vc.u32 %v494, %v490
    %v497 = vsel %vm496, 1, 0
    %v498 = vadd.s32 %v494, %v490
    %v499 = vadd.s32 %v495, %v497
    %v500 = vadd.s32 %v499, %v489
    %v501 = vadd.s32 %v500, %v491
    %v502 = vmul.u32 %v457, %v448
    %v503 = vadd.s32 %v479, %v498
    %vm504 = vc.u32 %v479, %v498
    %v505 = vadd.s32 %v501, 1
    %v506 = vsel %vm504, %v505, %v501
    %v507 = vadd.s32 %v502, %v506
    %v508 = vadd.s32 %v507, 536870912
    %v509 = vshrl.u32 %v508, 30
    %v510 = vshll.u32 %v509, 30
    %v511 = vsub.s32 %v507, %v510
    %vm512 = vcmp.lt.s32.totalorder %v511, 0
    %v513 = vsub.s32 0, %v511
    %v514 = vsel %vm512, %v513, %v511
    %v515 = vclz %v514
    %v516 = vsub.s32 %v515, 2
    %vm517 = vcmp.gt.s32.totalorder 0, %v516
    %v518 = vsel %vm517, 0, %v516
    %v519 = vsub.s32 32, %v518
    %v520 = vshll.u32 %v511, %v518
    %v521 = vshrl.u32 %v503, %v519
    %v522 = vor.u32 %v520, %v521
    %v523 = vsub.s32 4294967266, %v518
    %v524 = vadd.s32 %v523, 127
    %v525 = vshll.u32 %v524, 23
    %v526 = vor.u32 4788187, %v525
    %v527 = vand.u32 2147483647, %v526
    %v529 = vcvt.s32.f32 %v522
    %v530 = vmul.f32 %v529, %v527
    %v531 = vxor.u32 %v530, 2147483648
    %v532 = vsel %vm411, %v531, %v530
    %v533 = vsub.s32 4, %v509
    %v534 = vsel %vm411, %v533, %v509
    %v535 = vsel %vm410, %v100, %v532
    %v536 = vsel %vm410, 0, %v534
    %v537 = vmul.f32 %v535, %v535
    %v538 = vmul.f32 %v537, -0.001358992
    %v539 = vadd.f32 %v538, 0.041655596
    %v540 = vmul.f32 %v537, %v539
    %v541 = vadd.f32 %v540, -0.4999988
    %v542 = vmul.f32 %v537, %v541
    %v543 = vadd.f32 1.0, %v542
    %v544 = vmul.f32 %v535, %v535
    %v545 = vmul.f32 %v544, -0.00019511016
    %v546 = vadd.f32 %v545, 0.008332121
    %v547 = vmul.f32 %v544, %v546
    %v548 = vadd.f32 %v547, -0.16666654
    %v549 = vmul.f32 %v544, %v548
    %v550 = vadd.f32 %v549, 1.0
    %v551 = vmul.f32 %v550, %v535
    %vm552 = vweird.f32 %v100
    %v553 = vand.u32 %v536, 3
    %vm554 = vcmp.lt.s32.totalorder %v553, 2
    %vm555 = vcmp.eq.s32.totalorder %v553, 0
    %v556 = vxor.u32 %v551, 2147483648
    %v557 = vsel %vm555, %v543, %v556
    %vm558 = vcmp.eq.s32.totalorder %v553, 2
    %v559 = vxor.u32 %v543, 2147483648
    %v560 = vsel %vm558, %v559, %v551
    %v561 = vsel %vm554, %v557, %v560
    %v562 = vsel %vm552, nan, %v561
    %v563 = vsub.f32 1.0, %v254
    %v564 = vmul.f32 %v563, 0.5
    %v565 = vadd.f32 %v254, %v562
    %v566 = vmul.f32 %v565, 0.25
    %v567 = vsub.f32 1.0, %v408
    %v568 = vmul.f32 %v566, %v567
    %v569 = vadd.f32 %v564, %v568
    %v570 = vmax.f32 %v569, 0.0
    %v571 = vmin.f32 %v570, 1.0
    %v572 = vrsqrt.pop %v571
    %v573 = vmul.f32 %v572, %v571
    %v574 = vmul.f32 %v573, %v572
    %v575 = vmul.f32 0.5, %v574
    %v576 = vsub.f32 1.5, %v575
    %v577 = vmul.f32 %v572, %v576
    %v578 = vmul.f32 %v571, %v577
    %vm579 = vcmp.eq.f32.partialorder %v571, inf
    %v580 = vsel %vm579, %v571, %v578
    %vm581 = vcmp.eq.f32.partialorder %v571, 0.0
    %v582 = vand.u32 %v571, 2147483648
    %v583 = vsel %vm581, %v582, %v580
    %v584 = vsub.f32 1.0, %v571
    %v585 = vrsqrt.pop %v584
    %v586 = vmul.f32 %v585, %v584
    %v587 = vmul.f32 %v586, %v585
    %v588 = vmul.f32 0.5, %v587
    %v589 = vsub.f32 1.5, %v588
    %v590 = vmul.f32 %v585, %v589
    %v591 = vmul.f32 %v584, %v590
    %vm592 = vcmp.eq.f32.partialorder %v584, inf
    %v593 = vsel %vm592, %v584, %v591
    %vm594 = vcmp.eq.f32.partialorder %v584, 0.0
    %v595 = vand.u32 %v584, 2147483648
    %v596 = vsel %vm594, %v595, %v593
    %v597 = vand.u32 2147483647, %v596
    %v598 = vand.u32 2147483647, %v583
    %v599 = vmin.f32 %v597, %v598
    %v600 = vmax.f32 %v597, %v598
    %v601 = vrcp.pop %v600
    %v602 = vmul.f32 %v600, %v601
    %v603 = vsub.f32 1.0, %v602
    %v604 = vmul.f32 %v601, %v603
    %v605 = vadd.f32 %v601, %v604
    %vm606 = vweird.f32 %v600
    %vm607 = vweird.f32 %v601
    %vm608 = vmor %vm606, %vm607
    %v609 = vsel %vm608, %v601, %v605
    %v610 = vand.u32 2147483647, %v600
    %vm611 = vcmp.eq.f32.partialorder %v610, 8.507059e+37
    %v612 = vand.u32 %v600, 2147483648
    %v613 = vor.u32 1.1754944e-38, %v612
    %v614 = vsel %vm611, %v613, %v609
    %v615 = vmul.f32 %v599, %v614
    %v616 = vmul.f32 %v615, %v615
    %v617 = vmul.f32 0.002785687, %v616
    %v618 = vadd.f32 %v617, -0.015866
    %v619 = vmul.f32 %v618, %v616
    %v620 = vadd.f32 %v619, 0.04247222
    %v621 = vmul.f32 %v620, %v616
    %v622 = vadd.f32 %v621, -0.074975304
    %v623 = vmul.f32 %v622, %v616
    %v624 = vadd.f32 %v623, 0.1064488
    %v625 = vmul.f32 %v624, %v616
    %v626 = vadd.f32 %v625, -0.14207031
    %v627 = vmul.f32 %v626, %v616
    %v628 = vadd.f32 %v627, 0.19993454
    %v629 = vmul.f32 %v628, %v616
    %v630 = vadd.f32 %v629, -0.33333147
    %v631 = vmul.f32 %v630, %v616
    %v632 = vmul.f32 %v631, %v615
    %v633 = vadd.f32 %v632, %v615
    %vm634 = vcmp.gt.f32.partialorder %v598, %v597
    %v635 = vsub.f32 1.5707964, %v633
    %v636 = vsel %vm634, %v635, %v633
    %vm637 = vcmp.lt.f32.partialorder %v596, 0.0
    %v638 = vsub.f32 3.1415927, %v636
    %v639 = vsel %vm637, %v638, %v636
    %vm640 = vcmp.lt.s32.totalorder %v596, 0
    %v641 = vsel %vm640, 3.1415927, 0.0
    %vm642 = vcmp.eq.f32.partialorder %v583, 0.0
    %v643 = vsel %vm642, %v641, %v639
    %vm644 = vcmp.ne.f32.partialorder %v596, %v596
    %vm645 = vcmp.ne.f32.partialorder %v583, %v583
    %vm646 = vmor %vm644, %vm645
    %v647 = vsel %vm646, nan, %v643
    %vm648 = vcmp.lt.f32.partialorder %v596, 0.0
    %v649 = vsel %vm648, 2.3561945, 0.7853982
    %vm650 = vcmp.eq.s32.totalorder %v597, inf
    %vm651 = vcmp.eq.s32.totalorder %v598, inf
    %vm652 = vmand %vm650, %vm651
    %v653 = vsel %vm652, %v649, %v647
    %v654 = vand.u32 2147483647, %v653
    %v655 = vand.u32 %v583, 2147483648
    %v656 = vor.u32 %v654, %v655
    %v657 = vmul.f32 %v656, 2.0
    %v658 = vld [vmem:[#allocation8] sm:$0xff]
    %659 = vadd.xlane.f32.xlu0 %v657
    %v660 = vpop.xlane.xlu0 %659
    %v661 = vrot.slane %v660, 4
    %v662 = vadd.f32 %v660, %v661
    %v663 = vrot.slane %v662, 2
    %v664 = vadd.f32 %v662, %v663
    %v665 = vrot.slane %v664, 1
    %v666 = vadd.f32 %v664, %v665
    %s667 = vtos %v666
    %v668 = vstv %s667
    %v669 = vadd.f32 %v658, %v668
    %670 = vst [vmem:[#allocation8] sm:$0xff] %v669
    // Predicated region
    $region22: #{tpu_custom_call.1} parent=1 // pred_check
      _
    $region23: #{tpu_custom_call.1} parent=1 // pred_check_branch
      %672 = sbr.rel (0) target = $region25
    $region24: #{tpu_custom_call.1} parent=1 // pred_region
      %674 = vsyncadd [#allocation4], 0
      %s676 = sshll.u32 [#allocation7], 4
      %s677 = int_to_ptr.vmem [resolvable:$true] %s676
      %s678 = sshll.u32 %s2, 4
      %s679 = int_to_ptr.hbm [resolvable:$true] %s678
      %681 = dma.vmem_to_hbm [thread:$0]  %s677, 128, %s679, [#allocation4]
    $region25: #{tpu_custom_call.1} parent=1 // pred_fallthru
      _
    // Predicated region
    $region26: #{tpu_custom_call.1} parent=1 // pred_check
      _
    $region27: #{tpu_custom_call.1} parent=1 // pred_check_branch
      %683 = sbr.rel (0) target = $region29
    $region28: #{tpu_custom_call.1} parent=1 // pred_region
      %685 = vsyncadd [#allocation9], 0
      %s687 = sshll.u32 [#allocation8], 4
      %s688 = int_to_ptr.vmem [resolvable:$true] %s687
      %s689 = sshll.u32 %s3, 4
      %s690 = int_to_ptr.hbm [resolvable:$true] %s689
      %692 = dma.vmem_to_hbm [thread:$0]  %s688, 128, %s690, [#allocation9]
    $region29: #{tpu_custom_call.1} parent=1 // pred_fallthru
      _
    // Predicated region
    $region30: #{tpu_custom_call.1} parent=1 // pred_check
      _
    $region31: #{tpu_custom_call.1} parent=1 // pred_check_branch
      %694 = sbr.rel (0) target = $region33
    $region32: #{tpu_custom_call.1} parent=1 // pred_region
      %696 = dma.done [#allocation4], 128
    $region33: #{tpu_custom_call.1} parent=1 // pred_fallthru
      _
    // Predicated region
    $region34: #{tpu_custom_call.1} parent=1 // pred_check
      _
    $region35: #{tpu_custom_call.1} parent=1 // pred_check_branch
      %698 = sbr.rel (0) target = $region37
    $region36: #{tpu_custom_call.1} parent=1 // pred_region
      %700 = dma.done [#allocation9], 128
    $region37: #{tpu_custom_call.1} parent=1 // pred_fallthru
      _
    %701 = vsyncpa [#allocation3], 1
    %702 = vsyncpa [#allocation6], 1
    %703 = vsyncpa [#allocation4], 1
    %704 = vsyncpa [#allocation9], 1

</llo_original>
